<compile_context>
chip_gen: v5e
topology: v5e:2x2
jax: 0.10.0
libtpu: 0.0.40
codegen_flags: <defaults>
</compile_context>

<pallas_src>
import jax
import jax.numpy as jnp
import numpy as np
from jax.experimental import pallas as pl
from jax.experimental.pallas import tpu as pltpu

KSZ = 5          # the 5-tap kernel of the ww / hw convs
PAD = KSZ // 2   # padding = 2


def lsa_kernel(x_ref, w1_ref, b1_ref, m_ref, bias_ref, e_ref, out_ref):
    bt = x_ref.shape[0]          # batch tile
    c_in = w1_ref.shape[1]       # input channels of the 1x1 conv
    npix = out_ref.shape[1]      # H * W (lane-dense width)

    # --- 1x1 Conv + folded BN + ReLU (VPU, f32 accumulate, lane-dense). -----
    # TODO(synk): if the VALU slot saturates on v5e, this MAC loop can be
    # offloaded to the MXU as a block-diagonal bf16 matmul (see perf review).
    ys = []
    for c in range(2):
        acc = jnp.zeros((bt, npix), jnp.float32) + b1_ref[c]
        for ci in range(c_in):
            xi = x_ref[:, ci * npix:(ci + 1) * npix].astype(jnp.float32)
            acc = acc + xi * w1_ref[c, ci]
        ys.append(jnp.maximum(acc, 0.0))
    y = jnp.concatenate(ys, axis=1).astype(jnp.bfloat16)        # (bt, 2*HW)

    # --- Both branches, both channels: one fused banded bf16 MXU matmul. ----
    pre = jnp.dot(y, m_ref[...], preferred_element_type=jnp.float32)
    pre = pre + bias_ref[...]                                    # (bt, W+H)
    v = jax.nn.sigmoid(pre)                                      # (bt, W+H)

    # --- Fused block-diagonal expansion (single f32 matmul):
    #     left 256 lanes  = v_ww broadcast over h,
    #     right 256 lanes = v_hw broadcast over w;
    #     their product is the batched outer product hw @ ww^T, lane-dense.
    exp = jnp.dot(v, e_ref[...], preferred_element_type=jnp.float32)  # (bt, 2*HW)
    out_ref[...] = exp[:, :npix] * exp[:, npix:]


def lsa_forward(x, params):
    B, C, H, W = x.shape
    HW = H * W
    eps = 1e-5

    # --- Fold eval-mode BatchNorm into the 1x1 conv (conv has no bias). ------
    scale = params["bn_gamma"] / jnp.sqrt(params["bn_var"] + eps)
    w1f = (params["conv1_w"] * scale[:, None]).astype(jnp.float32)   # (2, C)
    b1f = (params["bn_beta"] - params["bn_mean"] * scale).astype(jnp.float32)

    # --- Fold ww branch: Conv2d(2,1,(H,5),pad=(0,2)) + Conv1d(W,W,1) ---------
    # Mww[c, h*W + w', w] = www_w[0, c, h, w'-w+2] (0 outside the 5-tap band)
    wp = jnp.arange(W)[:, None]
    w_ = jnp.arange(W)[None, :]
    kw = wp - w_ + PAD
    valid_w = (kw >= 0) & (kw < KSZ)
    kw_c = jnp.clip(kw, 0, KSZ - 1)
    band_ww = jnp.where(valid_w[None, None],
                        params["www_w"][0][:, :, kw_c], 0.0)          # (2,H,W,W)
    mww = band_ww.reshape(2, HW, W)
    mww_a = jnp.einsum('cjw,sw->cjs', mww, params["aww"])             # (2,HW,W)

    # --- Fold hw branch: Conv2d(2,1,(5,W),pad=(2,0)) + Conv1d(H,H,1) ---------
    # Mhw[c, h'*W + w, h] = whw_w[0, c, h'-h+2, w]
    hp = jnp.arange(H)[:, None]
    h_ = jnp.arange(H)[None, :]
    kh = hp - h_ + PAD
    valid_h = (kh >= 0) & (kh < KSZ)
    kh_c = jnp.clip(kh, 0, KSZ - 1)
    band_hw = jnp.where(valid_h[None, :, :, None],
                        params["whw_w"][0][:, kh_c, :], 0.0)          # (2,H,H,W)
    mhw = jnp.transpose(band_hw, (0, 1, 3, 2)).reshape(2, HW, H)
    mhw_a = jnp.einsum('cjh,sh->cjs', mhw, params["ahw"])             # (2,HW,H)

    # Fuse both branches (N) and both channels (K) into one bf16 weight.
    m_comb = jnp.concatenate([mww_a, mhw_a], axis=2)                  # (2,HW,W+H)
    m_comb = m_comb.reshape(2 * HW, W + H).astype(jnp.bfloat16)       # (2*HW,W+H)
    bias_comb = jnp.concatenate([params["bww"], params["bhw"]]
                                ).reshape(1, W + H).astype(jnp.float32)

    # Block-diagonal expansion matrix for the batched outer product (constant,
    # kept f32 — tiny matmul, preserves epilogue accuracy).
    e_w = jnp.tile(jnp.eye(W, dtype=jnp.float32), (1, H))             # (W, HW)
    e_h = jnp.repeat(jnp.eye(H, dtype=jnp.float32), W, axis=1)        # (H, HW)
    e_comb = jnp.zeros((W + H, 2 * HW), jnp.float32)
    e_comb = e_comb.at[:W, :HW].set(e_w)
    e_comb = e_comb.at[W:, HW:].set(e_h)

    # --- Lane-dense bf16 input; batch tile sized for >=2 grid steps on v7x ---
    def _rup(n, m):
        return ((n + m - 1) // m) * m

    x_flat = x.astype(jnp.bfloat16).reshape(B, C * HW)
    B_TILE = max(16, min(512, _rup(B, 16), _rup((B + 1) // 2, 16)))
    Bp = _rup(B, B_TILE)
    if Bp != B:
        x_flat = jnp.pad(x_flat, ((0, Bp - B), (0, 0)))

    grid_spec = pltpu.PrefetchScalarGridSpec(
        num_scalar_prefetch=0,
        grid=(Bp // B_TILE,),
        in_specs=[
            pl.BlockSpec((B_TILE, C * HW), lambda b: (b, 0)),          # x (bf16)
            pl.BlockSpec(memory_space=pltpu.MemorySpace.SMEM),         # w1f
            pl.BlockSpec(memory_space=pltpu.MemorySpace.SMEM),         # b1f
            pl.BlockSpec((2 * HW, W + H), lambda b: (0, 0)),           # m_comb
            pl.BlockSpec((1, W + H), lambda b: (0, 0)),                # bias_comb
            pl.BlockSpec((W + H, 2 * HW), lambda b: (0, 0)),           # e_comb
        ],
        out_specs=pl.BlockSpec((B_TILE, HW), lambda b: (b, 0)),
    )

    out_flat = pl.pallas_call(
        lsa_kernel,
        out_shape=jax.ShapeDtypeStruct((Bp, HW), jnp.float32),
        grid_spec=grid_spec,
        compiler_params=pltpu.CompilerParams(
            dimension_semantics=("parallel",)),
    )(x_flat, w1f, b1f, m_comb, bias_comb, e_comb)

    return out_flat[:B].reshape(B, 1, H, W)


def lsa_reference(x, params):
    """Pure-JAX reference of the PyTorch LSA forward (eval-mode BN)."""
    B, C, H, W = x.shape
    eps = 1e-5
    hi = jax.lax.Precision.HIGHEST
    scale = params["bn_gamma"] / jnp.sqrt(params["bn_var"] + eps)
    z = jnp.einsum('bchw,oc->bohw', x, params["conv1_w"], precision=hi)
    y = jnp.maximum(
        (z - params["bn_mean"][None, :, None, None]) * scale[None, :, None, None]
        + params["bn_beta"][None, :, None, None], 0.0)

    # ww branch: Conv2d(2, 1, (H, 5), padding=(0, 2))
    ypw = jnp.pad(y, ((0, 0), (0, 0), (0, 0), (PAD, PAD)))
    ww_pre = jnp.zeros((B, W), jnp.float32)
    for kw in range(KSZ):
        ww_pre = ww_pre + jnp.einsum('bchw,ch->bw', ypw[:, :, :, kw:kw + W],
                                     params["www_w"][0, :, :, kw], precision=hi)
    # hw branch: Conv2d(2, 1, (5, W), padding=(2, 0))
    yph = jnp.pad(y, ((0, 0), (0, 0), (PAD, PAD), (0, 0)))
    hw_pre = jnp.zeros((B, H), jnp.float32)
    for kh in range(KSZ):
        hw_pre = hw_pre + jnp.einsum('bchw,cw->bh', yph[:, :, kh:kh + H, :],
                                     params["whw_w"][0, :, kh, :], precision=hi)

    v_ww = jax.nn.sigmoid(ww_pre @ params["aww"].T + params["bww"][None, :])
    v_hw = jax.nn.sigmoid(hw_pre @ params["ahw"].T + params["bhw"][None, :])
    return (v_hw[:, :, None] * v_ww[:, None, :])[:, None, :, :]


if __name__ == "__main__":
    B, DIM, SIZE = 2, 4, 16   # x: (B, dim, size, size)
    key = jax.random.PRNGKey(0)
    ks = jax.random.split(key, 12)

    x = jax.random.normal(ks[0], (B, DIM, SIZE, SIZE), jnp.float32)
    params = dict(
        conv1_w=0.3 * jax.random.normal(ks[1], (2, DIM), jnp.float32),
        bn_gamma=1.0 + 0.1 * jax.random.normal(ks[2], (2,), jnp.float32),
        bn_beta=0.1 * jax.random.normal(ks[3], (2,), jnp.float32),
        bn_mean=0.1 * jax.random.normal(ks[4], (2,), jnp.float32),
        bn_var=0.5 + jax.random.uniform(ks[5], (2,), dtype=jnp.float32),
        www_w=0.2 * jax.random.normal(ks[6], (1, 2, SIZE, 5), jnp.float32),
        whw_w=0.2 * jax.random.normal(ks[7], (1, 2, 5, SIZE), jnp.float32),
        aww=0.2 * jax.random.normal(ks[8], (SIZE, SIZE), jnp.float32),
        bww=0.1 * jax.random.normal(ks[9], (SIZE,), jnp.float32),
        ahw=0.2 * jax.random.normal(ks[10], (SIZE, SIZE), jnp.float32),
        bhw=0.1 * jax.random.normal(ks[11], (SIZE,), jnp.float32),
    )

    out = jax.block_until_ready(lsa_forward(x, params))
    ref = np.asarray(lsa_reference(x, params))

    assert out.shape == (B, 1, SIZE, SIZE), out.shape
    err = float(np.max(np.abs(np.asarray(out) - ref)))
    assert np.allclose(np.asarray(out), ref, atol=1e-2, rtol=1e-2), err
    print("KERNEL_OK")
</pallas_src>

<mosaic_0001>
module attributes {stable_mosaic.version = 11 : i64} {
  func.func @lsa_kernel(%arg0: i32, %arg1: memref<16x1024xbf16, #tpu.memory_space<vmem>>, %arg2: memref<2x4xf32, #tpu.memory_space<smem>>, %arg3: memref<2xf32, #tpu.memory_space<smem>>, %arg4: memref<512x32xbf16, #tpu.memory_space<vmem>>, %arg5: memref<1x32xf32, #tpu.memory_space<vmem>>, %arg6: memref<32x512xf32, #tpu.memory_space<vmem>>, %arg7: memref<16x256xf32, #tpu.memory_space<vmem>>) attributes {dimension_semantics = [#tpu.dimension_semantics<parallel>], iteration_bounds = array<i64: 1>, scalar_prefetch = 0 : i64, scratch_operands = 0 : i64, tpu.core_type = #tpu.core_type<tc>, window_params = [{transform_indices = @transform_0, window_bounds = array<i64: 16, 1024>}, {transform_indices = @transform_1, window_bounds = array<i64: 2, 4>}, {transform_indices = @transform_2, window_bounds = array<i64: 2>}, {pipeline_mode = #tpu.pipeline_mode<synchronous>, transform_indices = @transform_3, window_bounds = array<i64: 512, 32>}, {pipeline_mode = #tpu.pipeline_mode<synchronous>, transform_indices = @transform_4, window_bounds = array<i64: 1, 32>}, {pipeline_mode = #tpu.pipeline_mode<synchronous>, transform_indices = @transform_5, window_bounds = array<i64: 32, 512>}, {transform_indices = @transform_6, window_bounds = array<i64: 16, 256>}]} {
    %cst = arith.constant 0.000000e+00 : f32
    %0 = vector.broadcast %cst : f32 to vector<16x256xf32>
    %c0 = arith.constant 0 : index
    %1 = memref.load %arg3[%c0] : memref<2xf32, #tpu.memory_space<smem>>
    %2 = vector.broadcast %1 : f32 to vector<16x256xf32>
    %3 = arith.addf %0, %2 : vector<16x256xf32>
    %c0_0 = arith.constant 0 : index
    %c0_1 = arith.constant 0 : index
    %4 = vector.load %arg1[%c0_0, %c0_1] : memref<16x1024xbf16, #tpu.memory_space<vmem>>, vector<16x256xbf16>
    %5 = arith.extf %4 : vector<16x256xbf16> to vector<16x256xf32>
    %c0_2 = arith.constant 0 : index
    %c0_3 = arith.constant 0 : index
    %6 = memref.load %arg2[%c0_2, %c0_3] : memref<2x4xf32, #tpu.memory_space<smem>>
    %7 = vector.broadcast %6 : f32 to vector<16x256xf32>
    %8 = arith.mulf %5, %7 : vector<16x256xf32>
    %9 = arith.addf %3, %8 : vector<16x256xf32>
    %c0_4 = arith.constant 0 : index
    %c256 = arith.constant 256 : index
    %10 = vector.load %arg1[%c0_4, %c256] : memref<16x1024xbf16, #tpu.memory_space<vmem>>, vector<16x256xbf16>
    %11 = arith.extf %10 : vector<16x256xbf16> to vector<16x256xf32>
    %c0_5 = arith.constant 0 : index
    %c1 = arith.constant 1 : index
    %12 = memref.load %arg2[%c0_5, %c1] : memref<2x4xf32, #tpu.memory_space<smem>>
    %13 = vector.broadcast %12 : f32 to vector<16x256xf32>
    %14 = arith.mulf %11, %13 : vector<16x256xf32>
    %15 = arith.addf %9, %14 : vector<16x256xf32>
    %c0_6 = arith.constant 0 : index
    %c512 = arith.constant 512 : index
    %16 = vector.load %arg1[%c0_6, %c512] : memref<16x1024xbf16, #tpu.memory_space<vmem>>, vector<16x256xbf16>
    %17 = arith.extf %16 : vector<16x256xbf16> to vector<16x256xf32>
    %c0_7 = arith.constant 0 : index
    %c2 = arith.constant 2 : index
    %18 = memref.load %arg2[%c0_7, %c2] : memref<2x4xf32, #tpu.memory_space<smem>>
    %19 = vector.broadcast %18 : f32 to vector<16x256xf32>
    %20 = arith.mulf %17, %19 : vector<16x256xf32>
    %21 = arith.addf %15, %20 : vector<16x256xf32>
    %c0_8 = arith.constant 0 : index
    %c768 = arith.constant 768 : index
    %22 = vector.load %arg1[%c0_8, %c768] : memref<16x1024xbf16, #tpu.memory_space<vmem>>, vector<16x256xbf16>
    %23 = arith.extf %22 : vector<16x256xbf16> to vector<16x256xf32>
    %c0_9 = arith.constant 0 : index
    %c3 = arith.constant 3 : index
    %24 = memref.load %arg2[%c0_9, %c3] : memref<2x4xf32, #tpu.memory_space<smem>>
    %25 = vector.broadcast %24 : f32 to vector<16x256xf32>
    %26 = arith.mulf %23, %25 : vector<16x256xf32>
    %27 = arith.addf %21, %26 : vector<16x256xf32>
    %cst_10 = arith.constant 0.000000e+00 : f32
    %28 = vector.broadcast %cst_10 : f32 to vector<16x256xf32>
    %29 = arith.maximumf %27, %28 : vector<16x256xf32>
    %cst_11 = arith.constant 0.000000e+00 : f32
    %30 = vector.broadcast %cst_11 : f32 to vector<16x256xf32>
    %c1_12 = arith.constant 1 : index
    %31 = memref.load %arg3[%c1_12] : memref<2xf32, #tpu.memory_space<smem>>
    %32 = vector.broadcast %31 : f32 to vector<16x256xf32>
    %33 = arith.addf %30, %32 : vector<16x256xf32>
    %c0_13 = arith.constant 0 : index
    %c0_14 = arith.constant 0 : index
    %34 = vector.load %arg1[%c0_13, %c0_14] : memref<16x1024xbf16, #tpu.memory_space<vmem>>, vector<16x256xbf16>
    %35 = arith.extf %34 : vector<16x256xbf16> to vector<16x256xf32>
    %c1_15 = arith.constant 1 : index
    %c0_16 = arith.constant 0 : index
    %36 = memref.load %arg2[%c1_15, %c0_16] : memref<2x4xf32, #tpu.memory_space<smem>>
    %37 = vector.broadcast %36 : f32 to vector<16x256xf32>
    %38 = arith.mulf %35, %37 : vector<16x256xf32>
    %39 = arith.addf %33, %38 : vector<16x256xf32>
    %c0_17 = arith.constant 0 : index
    %c256_18 = arith.constant 256 : index
    %40 = vector.load %arg1[%c0_17, %c256_18] : memref<16x1024xbf16, #tpu.memory_space<vmem>>, vector<16x256xbf16>
    %41 = arith.extf %40 : vector<16x256xbf16> to vector<16x256xf32>
    %c1_19 = arith.constant 1 : index
    %c1_20 = arith.constant 1 : index
    %42 = memref.load %arg2[%c1_19, %c1_20] : memref<2x4xf32, #tpu.memory_space<smem>>
    %43 = vector.broadcast %42 : f32 to vector<16x256xf32>
    %44 = arith.mulf %41, %43 : vector<16x256xf32>
    %45 = arith.addf %39, %44 : vector<16x256xf32>
    %c0_21 = arith.constant 0 : index
    %c512_22 = arith.constant 512 : index
    %46 = vector.load %arg1[%c0_21, %c512_22] : memref<16x1024xbf16, #tpu.memory_space<vmem>>, vector<16x256xbf16>
    %47 = arith.extf %46 : vector<16x256xbf16> to vector<16x256xf32>
    %c1_23 = arith.constant 1 : index
    %c2_24 = arith.constant 2 : index
    %48 = memref.load %arg2[%c1_23, %c2_24] : memref<2x4xf32, #tpu.memory_space<smem>>
    %49 = vector.broadcast %48 : f32 to vector<16x256xf32>
    %50 = arith.mulf %47, %49 : vector<16x256xf32>
    %51 = arith.addf %45, %50 : vector<16x256xf32>
    %c0_25 = arith.constant 0 : index
    %c768_26 = arith.constant 768 : index
    %52 = vector.load %arg1[%c0_25, %c768_26] : memref<16x1024xbf16, #tpu.memory_space<vmem>>, vector<16x256xbf16>
    %53 = arith.extf %52 : vector<16x256xbf16> to vector<16x256xf32>
    %c1_27 = arith.constant 1 : index
    %c3_28 = arith.constant 3 : index
    %54 = memref.load %arg2[%c1_27, %c3_28] : memref<2x4xf32, #tpu.memory_space<smem>>
    %55 = vector.broadcast %54 : f32 to vector<16x256xf32>
    %56 = arith.mulf %53, %55 : vector<16x256xf32>
    %57 = arith.addf %51, %56 : vector<16x256xf32>
    %cst_29 = arith.constant 0.000000e+00 : f32
    %58 = vector.broadcast %cst_29 : f32 to vector<16x256xf32>
    %59 = arith.maximumf %57, %58 : vector<16x256xf32>
    %60 = tpu.concatenate %29, %59 in 1 : vector<16x256xf32>, vector<16x256xf32> -> vector<16x512xf32>
    %61 = arith.truncf %60 : vector<16x512xf32> to vector<16x512xbf16>
    %c0_30 = arith.constant 0 : index
    %c0_31 = arith.constant 0 : index
    %62 = vector.load %arg4[%c0_30, %c0_31] : memref<512x32xbf16, #tpu.memory_space<vmem>>, vector<512x32xbf16>
    %cst_32 = arith.constant dense<0.000000e+00> : vector<16x32xf32>
    %63 = tpu.matmul %61, %62, %cst_32 {dimension_numbers = #tpu.dot_dimension_numbers<[1], [0], [0], [1], [0, 0, 1, 1], [], []>} : vector<16x512xbf16>, vector<512x32xbf16>, vector<16x32xf32> -> vector<16x32xf32>
    %c0_33 = arith.constant 0 : index
    %c0_34 = arith.constant 0 : index
    %64 = vector.load %arg5[%c0_33, %c0_34] : memref<1x32xf32, #tpu.memory_space<vmem>>, vector<1x32xf32>
    %65 = vector.broadcast %64 : vector<1x32xf32> to vector<16x32xf32>
    %66 = arith.addf %63, %65 : vector<16x32xf32>
    %67 = arith.negf %66 : vector<16x32xf32>
    %68 = math.exp %67 : vector<16x32xf32>
    %cst_35 = arith.constant 1.000000e+00 : f32
    %69 = vector.broadcast %cst_35 : f32 to vector<16x32xf32>
    %70 = arith.addf %69, %68 : vector<16x32xf32>
    %71 = arith.divf %69, %70 : vector<16x32xf32>
    %c0_36 = arith.constant 0 : index
    %c0_37 = arith.constant 0 : index
    %72 = vector.load %arg6[%c0_36, %c0_37] : memref<32x512xf32, #tpu.memory_space<vmem>>, vector<32x512xf32>
    %cst_38 = arith.constant dense<0.000000e+00> : vector<16x512xf32>
    %73 = tpu.matmul %71, %72, %cst_38 {dimension_numbers = #tpu.dot_dimension_numbers<[1], [0], [0], [1], [0, 0, 1, 1], [], []>} : vector<16x32xf32>, vector<32x512xf32>, vector<16x512xf32> -> vector<16x512xf32>
    %74 = vector.extract_strided_slice %73 {offsets = [0, 0], sizes = [16, 256], strides = [1, 1]} : vector<16x512xf32> to vector<16x256xf32>
    %75 = vector.extract_strided_slice %73 {offsets = [0, 256], sizes = [16, 256], strides = [1, 1]} : vector<16x512xf32> to vector<16x256xf32>
    %76 = arith.mulf %74, %75 : vector<16x256xf32>
    %c0_39 = arith.constant 0 : index
    %c0_40 = arith.constant 0 : index
    %77 = vector.load %arg7[%c0_39, %c0_40] : memref<16x256xf32, #tpu.memory_space<vmem>>, vector<16x256xf32>
    tpu.vector_store %arg7[%c0_39, %c0_40], %76 {strides = array<i32>} : memref<16x256xf32, #tpu.memory_space<vmem>>, vector<16x256xf32>,
    return
  }
  func.func @transform_0(%arg0: i32) -> (i32, i32) {
    %c0_i32 = arith.constant 0 : i32
    %c0_i32_0 = arith.constant 0 : i32
    return %arg0, %c0_i32 : i32, i32
  }
  func.func @transform_1(%arg0: i32) -> (i32, i32) {
    %c0_i32 = arith.constant 0 : i32
    %c0_i32_0 = arith.constant 0 : i32
    %c0_i32_1 = arith.constant 0 : i32
    return %c0_i32, %c0_i32_0 : i32, i32
  }
  func.func @transform_2(%arg0: i32) -> i32 {
    %c0_i32 = arith.constant 0 : i32
    %c0_i32_0 = arith.constant 0 : i32
    return %c0_i32 : i32
  }
  func.func @transform_3(%arg0: i32) -> (i32, i32) {
    %c0_i32 = arith.constant 0 : i32
    %c0_i32_0 = arith.constant 0 : i32
    %c0_i32_1 = arith.constant 0 : i32
    return %c0_i32, %c0_i32_0 : i32, i32
  }
  func.func @transform_4(%arg0: i32) -> (i32, i32) {
    %c0_i32 = arith.constant 0 : i32
    %c0_i32_0 = arith.constant 0 : i32
    %c0_i32_1 = arith.constant 0 : i32
    return %c0_i32, %c0_i32_0 : i32, i32
  }
  func.func @transform_5(%arg0: i32) -> (i32, i32) {
    %c0_i32 = arith.constant 0 : i32
    %c0_i32_0 = arith.constant 0 : i32
    %c0_i32_1 = arith.constant 0 : i32
    return %c0_i32, %c0_i32_0 : i32, i32
  }
  func.func @transform_6(%arg0: i32) -> (i32, i32) {
    %c0_i32 = arith.constant 0 : i32
    %c0_i32_0 = arith.constant 0 : i32
    return %arg0, %c0_i32 : i32, i32
  }
}

</mosaic_0001>

<llo_original>
// kernel: tpu_custom_call.1
$region0: #{tpu_custom_call.1}
  #allocation0 [shape = 'u32[]', space=smem, size = 0x4, offset = 0x4, fixed_abs, tag = 'smem constant byte address 0x4 - core index']
  #allocation1 [shape = 'u32[72,128]{1,0:T(1,128)}', space=vmem, size = 0x9000, scoped, tag = 'internal scratch']
  %s0 = inlined_call_operand.vmem [shape: bf16[16,1024], index: 0, kind: input, shape index: {}]
  %s1 = inlined_call_operand.vmem [shape: f32[2,4], index: 1, kind: input, shape index: {}]
  %s2 = inlined_call_operand.vmem [shape: f32[2], index: 2, kind: input, shape index: {}]
  %s3 = inlined_call_operand.vmem [shape: bf16[512,32], index: 3, kind: input, shape index: {}]
  %s4 = inlined_call_operand.vmem [shape: f32[1,32], index: 4, kind: input, shape index: {}]
  %s5 = inlined_call_operand.vmem [shape: f32[32,512], index: 5, kind: input, shape index: {}]
  %s6 = inlined_call_operand.hbm [shape: f32[16,256], index: 6, kind: output, shape index: {}]
  %s7 = sld [smem:[#allocation0]]
  $region42: #{tpu_custom_call.1} parent=0
    _
  %s9 = ssub.s32 1, %s7
  %s10 = scalar_select 0, %s9, %s7
  $region1: #{tpu_custom_call.1} parent=0
    #allocation2 [shape = 'u8[1024]{0}', space=smem, size = 0x400, scoped, tag = 'input window, operand 1, single buffered']
    #allocation3 [shape = 's32[1]{0}', space=sflag, size = 0x4, scoped, tag = 'scoped memory for tpu_custom_call.1']
    #allocation4 [shape = 's32[1]{0}', space=sflag, size = 0x4, scoped, tag = 'scoped memory for tpu_custom_call.1']
    #allocation5 [shape = 'u8[512]{0}', space=smem, size = 0x200, scoped, tag = 'input window, operand 2, single buffered']
    #allocation6 [shape = 's32[1]{0}', space=sflag, size = 0x4, scoped, tag = 'scoped memory for tpu_custom_call.1']
    #allocation7 [shape = 'u8[16384]{0}', space=vmem, size = 0x4000, scoped, tag = 'output window, operand 0, single buffered']
    %11 = vsyncpa [#allocation4], 0
    %12 = vsyncpa [#allocation6], 0
    %13 = vsyncpa [#allocation3], 0
    // Predicated region
    $region2: #{tpu_custom_call.1} parent=1 // pred_check
      _
    $region3: #{tpu_custom_call.1} parent=1 // pred_check_branch
      %15 = sbr.rel (0) target = $region5
    $region4: #{tpu_custom_call.1} parent=1 // pred_region
      _
    $region5: #{tpu_custom_call.1} parent=1 // pred_fallthru
      _
    // Predicated region
    $region6: #{tpu_custom_call.1} parent=1 // pred_check
      _
    $region7: #{tpu_custom_call.1} parent=1 // pred_check_branch
      %17 = sbr.rel (0) target = $region9
    $region8: #{tpu_custom_call.1} parent=1 // pred_region
      %19 = vsyncadd [#allocation4], 0
      %s21 = sshll.u32 %s1, 4
      %s22 = int_to_ptr.vmem [resolvable:$true] %s21
      %24 = dma.vmem_to_smem %s22, 32, [#allocation2], [#allocation4]
    $region9: #{tpu_custom_call.1} parent=1 // pred_fallthru
      _
    // Predicated region
    $region10: #{tpu_custom_call.1} parent=1 // pred_check
      _
    $region11: #{tpu_custom_call.1} parent=1 // pred_check_branch
      %26 = sbr.rel (0) target = $region13
    $region12: #{tpu_custom_call.1} parent=1 // pred_region
      %28 = vsyncadd [#allocation6], 0
      %s30 = sshll.u32 %s2, 4
      %s31 = int_to_ptr.vmem [resolvable:$true] %s30
      %33 = dma.vmem_to_smem %s31, 16, [#allocation5], [#allocation6]
    $region13: #{tpu_custom_call.1} parent=1 // pred_fallthru
      _
    // Predicated region
    $region14: #{tpu_custom_call.1} parent=1 // pred_check
      _
    $region15: #{tpu_custom_call.1} parent=1 // pred_check_branch
      %35 = sbr.rel (0) target = $region17
    $region16: #{tpu_custom_call.1} parent=1 // pred_region
      _
    $region17: #{tpu_custom_call.1} parent=1 // pred_fallthru
      _
    // Predicated region
    $region18: #{tpu_custom_call.1} parent=1 // pred_check
      _
    $region19: #{tpu_custom_call.1} parent=1 // pred_check_branch
      %37 = sbr.rel (0) target = $region21
    $region20: #{tpu_custom_call.1} parent=1 // pred_region
      _
    $region21: #{tpu_custom_call.1} parent=1 // pred_fallthru
      _
    // Predicated region
    $region22: #{tpu_custom_call.1} parent=1 // pred_check
      _
    $region23: #{tpu_custom_call.1} parent=1 // pred_check_branch
      %39 = sbr.rel (0) target = $region25
    $region24: #{tpu_custom_call.1} parent=1 // pred_region
      _
    $region25: #{tpu_custom_call.1} parent=1 // pred_fallthru
      _
    // Predicated region
    $region26: #{tpu_custom_call.1} parent=1 // pred_check
      _
    $region27: #{tpu_custom_call.1} parent=1 // pred_check_branch
      %41 = sbr.rel (0) target = $region29
    $region28: #{tpu_custom_call.1} parent=1 // pred_region
      %43 = dma.done [#allocation4], 32
    $region29: #{tpu_custom_call.1} parent=1 // pred_fallthru
      _
    // Predicated region
    $region30: #{tpu_custom_call.1} parent=1 // pred_check
      _
    $region31: #{tpu_custom_call.1} parent=1 // pred_check_branch
      %45 = sbr.rel (0) target = $region33
    $region32: #{tpu_custom_call.1} parent=1 // pred_region
      %47 = dma.done [#allocation6], 16
    $region33: #{tpu_custom_call.1} parent=1 // pred_fallthru
      _
    %48 = sfence
    %s49 = sld [smem:[#allocation5]]
    %v50 = vstv %s49
    %v51 = vadd.f32 %v50, 0.0
    %v52 = vld [vmem:[%s0] sm:$0xff]
    %v53 = vld [vmem:[%s0 + $0x20] sm:$0xff]
    %v54 = vunpack.c.l.bf16 %v52
    %v55 = vunpack.c.h.bf16 %v52
    %v56 = vunpack.c.l.bf16 %v53
    %v57 = vunpack.c.h.bf16 %v53
    %s58 = sld [smem:[#allocation2]]
    %v59 = vstv %s58
    %v60 = vmul.f32 %v54, %v59
    %v61 = vmul.f32 %v55, %v59
    %v62 = vmul.f32 %v56, %v59
    %v63 = vmul.f32 %v57, %v59
    %v64 = vadd.f32 %v51, %v60
    %v65 = vadd.f32 %v51, %v61
    %v66 = vadd.f32 %v51, %v62
    %v67 = vadd.f32 %v51, %v63
    %v68 = vld [vmem:[%s0 + $0x8] sm:$0xff]
    %v69 = vld [vmem:[%s0 + $0x28] sm:$0xff]
    %v70 = vunpack.c.l.bf16 %v68
    %v71 = vunpack.c.h.bf16 %v68
    %v72 = vunpack.c.l.bf16 %v69
    %v73 = vunpack.c.h.bf16 %v69
    %s74 = sld [smem:[#allocation2 + $0x1]]
    %v75 = vstv %s74
    %v76 = vmul.f32 %v70, %v75
    %v77 = vmul.f32 %v71, %v75
    %v78 = vmul.f32 %v72, %v75
    %v79 = vmul.f32 %v73, %v75
    %v80 = vadd.f32 %v64, %v76
    %v81 = vadd.f32 %v65, %v77
    %v82 = vadd.f32 %v66, %v78
    %v83 = vadd.f32 %v67, %v79
    %v84 = vld [vmem:[%s0 + $0x10] sm:$0xff]
    %v85 = vld [vmem:[%s0 + $0x30] sm:$0xff]
    %v86 = vunpack.c.l.bf16 %v84
    %v87 = vunpack.c.h.bf16 %v84
    %v88 = vunpack.c.l.bf16 %v85
    %v89 = vunpack.c.h.bf16 %v85
    %s90 = sld [smem:[#allocation2 + $0x2]]
    %v91 = vstv %s90
    %v92 = vmul.f32 %v86, %v91
    %v93 = vmul.f32 %v87, %v91
    %v94 = vmul.f32 %v88, %v91
    %v95 = vmul.f32 %v89, %v91
    %v96 = vadd.f32 %v80, %v92
    %v97 = vadd.f32 %v81, %v93
    %v98 = vadd.f32 %v82, %v94
    %v99 = vadd.f32 %v83, %v95
    %v100 = vld [vmem:[%s0 + $0x18] sm:$0xff]
    %v101 = vld [vmem:[%s0 + $0x38] sm:$0xff]
    %v102 = vunpack.c.l.bf16 %v100
    %v103 = vunpack.c.h.bf16 %v100
    %v104 = vunpack.c.l.bf16 %v101
    %v105 = vunpack.c.h.bf16 %v101
    %s106 = sld [smem:[#allocation2 + $0x3]]
    %v107 = vstv %s106
    %v108 = vmul.f32 %v102, %v107
    %v109 = vmul.f32 %v103, %v107
    %v110 = vmul.f32 %v104, %v107
    %v111 = vmul.f32 %v105, %v107
    %v112 = vadd.f32 %v96, %v108
    %v113 = vadd.f32 %v97, %v109
    %v114 = vadd.f32 %v98, %v110
    %v115 = vadd.f32 %v99, %v111
    %v116 = vmax.f32 %v112, 0.0
    %v117 = vmax.f32 %v113, 0.0
    %v118 = vmax.f32 %v114, 0.0
    %v119 = vmax.f32 %v115, 0.0
    %s120 = sld [smem:[#allocation5 + $0x1]]
    %v121 = vstv %s120
    %v122 = vadd.f32 %v121, 0.0
    %s123 = sld [smem:[#allocation2 + $0x80]]
    %v124 = vstv %s123
    %v125 = vmul.f32 %v54, %v124
    %v126 = vmul.f32 %v55, %v124
    %v127 = vmul.f32 %v56, %v124
    %v128 = vmul.f32 %v57, %v124
    %v129 = vadd.f32 %v122, %v125
    %v130 = vadd.f32 %v122, %v126
    %v131 = vadd.f32 %v122, %v127
    %v132 = vadd.f32 %v122, %v128
    %s133 = sld [smem:[#allocation2 + $0x81]]
    %v134 = vstv %s133
    %v135 = vmul.f32 %v70, %v134
    %v136 = vmul.f32 %v71, %v134
    %v137 = vmul.f32 %v72, %v134
    %v138 = vmul.f32 %v73, %v134
    %v139 = vadd.f32 %v129, %v135
    %v140 = vadd.f32 %v130, %v136
    %v141 = vadd.f32 %v131, %v137
    %v142 = vadd.f32 %v132, %v138
    %s143 = sld [smem:[#allocation2 + $0x82]]
    %v144 = vstv %s143
    %v145 = vmul.f32 %v86, %v144
    %v146 = vmul.f32 %v87, %v144
    %v147 = vmul.f32 %v88, %v144
    %v148 = vmul.f32 %v89, %v144
    %v149 = vadd.f32 %v139, %v145
    %v150 = vadd.f32 %v140, %v146
    %v151 = vadd.f32 %v141, %v147
    %v152 = vadd.f32 %v142, %v148
    %s153 = sld [smem:[#allocation2 + $0x83]]
    %v154 = vstv %s153
    %v155 = vmul.f32 %v102, %v154
    %v156 = vmul.f32 %v103, %v154
    %v157 = vmul.f32 %v104, %v154
    %v158 = vmul.f32 %v105, %v154
    %v159 = vadd.f32 %v149, %v155
    %v160 = vadd.f32 %v150, %v156
    %v161 = vadd.f32 %v151, %v157
    %v162 = vadd.f32 %v152, %v158
    %v163 = vmax.f32 %v159, 0.0
    %v164 = vmax.f32 %v160, 0.0
    %v165 = vmax.f32 %v161, 0.0
    %v166 = vmax.f32 %v162, 0.0
    %v167 = vpack.c.bf16 %v118, %v116
    %v168 = vpack.c.bf16 %v119, %v117
    %v169 = vpack.c.bf16 %v165, %v163
    %v170 = vpack.c.bf16 %v166, %v164
    %v171 = vld [vmem:[%s3] sm:$0xf]
    %v172 = vld [vmem:[%s3 + $0x4] sm:$0xf]
    %v173 = vld [vmem:[%s3 + $0x8] sm:$0xf]
    %v174 = vld [vmem:[%s3 + $0xc] sm:$0xf]
    %v175 = vld [vmem:[%s3 + $0x10] sm:$0xf]
    %v176 = vld [vmem:[%s3 + $0x14] sm:$0xf]
    %v177 = vld [vmem:[%s3 + $0x18] sm:$0xf]
    %v178 = vld [vmem:[%s3 + $0x1c] sm:$0xf]
    %v179 = vld [vmem:[%s3 + $0x20] sm:$0xf]
    %v180 = vld [vmem:[%s3 + $0x24] sm:$0xf]
    %v181 = vld [vmem:[%s3 + $0x28] sm:$0xf]
    %v182 = vld [vmem:[%s3 + $0x2c] sm:$0xf]
    %v183 = vld [vmem:[%s3 + $0x30] sm:$0xf]
    %v184 = vld [vmem:[%s3 + $0x34] sm:$0xf]
    %v185 = vld [vmem:[%s3 + $0x38] sm:$0xf]
    %v186 = vld [vmem:[%s3 + $0x3c] sm:$0xf]
    %v187 = vld [vmem:[%s3 + $0x40] sm:$0xf]
    %v188 = vld [vmem:[%s3 + $0x44] sm:$0xf]
    %v189 = vld [vmem:[%s3 + $0x48] sm:$0xf]
    %v190 = vld [vmem:[%s3 + $0x4c] sm:$0xf]
    %v191 = vld [vmem:[%s3 + $0x50] sm:$0xf]
    %v192 = vld [vmem:[%s3 + $0x54] sm:$0xf]
    %v193 = vld [vmem:[%s3 + $0x58] sm:$0xf]
    %v194 = vld [vmem:[%s3 + $0x5c] sm:$0xf]
    %v195 = vld [vmem:[%s3 + $0x60] sm:$0xf]
    %v196 = vld [vmem:[%s3 + $0x64] sm:$0xf]
    %v197 = vld [vmem:[%s3 + $0x68] sm:$0xf]
    %v198 = vld [vmem:[%s3 + $0x6c] sm:$0xf]
    %v199 = vld [vmem:[%s3 + $0x70] sm:$0xf]
    %v200 = vld [vmem:[%s3 + $0x74] sm:$0xf]
    %v201 = vld [vmem:[%s3 + $0x78] sm:$0xf]
    %v202 = vld [vmem:[%s3 + $0x7c] sm:$0xf]
    %v203 = vld [vmem:[%s3 + $0x80] sm:$0xf]
    %v204 = vld [vmem:[%s3 + $0x84] sm:$0xf]
    %v205 = vld [vmem:[%s3 + $0x88] sm:$0xf]
    %v206 = vld [vmem:[%s3 + $0x8c] sm:$0xf]
    %v207 = vld [vmem:[%s3 + $0x90] sm:$0xf]
    %v208 = vld [vmem:[%s3 + $0x94] sm:$0xf]
    %v209 = vld [vmem:[%s3 + $0x98] sm:$0xf]
    %v210 = vld [vmem:[%s3 + $0x9c] sm:$0xf]
    %v211 = vld [vmem:[%s3 + $0xa0] sm:$0xf]
    %v212 = vld [vmem:[%s3 + $0xa4] sm:$0xf]
    %v213 = vld [vmem:[%s3 + $0xa8] sm:$0xf]
    %v214 = vld [vmem:[%s3 + $0xac] sm:$0xf]
    %v215 = vld [vmem:[%s3 + $0xb0] sm:$0xf]
    %v216 = vld [vmem:[%s3 + $0xb4] sm:$0xf]
    %v217 = vld [vmem:[%s3 + $0xb8] sm:$0xf]
    %v218 = vld [vmem:[%s3 + $0xbc] sm:$0xf]
    %v219 = vld [vmem:[%s3 + $0xc0] sm:$0xf]
    %v220 = vld [vmem:[%s3 + $0xc4] sm:$0xf]
    %v221 = vld [vmem:[%s3 + $0xc8] sm:$0xf]
    %v222 = vld [vmem:[%s3 + $0xcc] sm:$0xf]
    %v223 = vld [vmem:[%s3 + $0xd0] sm:$0xf]
    %v224 = vld [vmem:[%s3 + $0xd4] sm:$0xf]
    %v225 = vld [vmem:[%s3 + $0xd8] sm:$0xf]
    %v226 = vld [vmem:[%s3 + $0xdc] sm:$0xf]
    %v227 = vld [vmem:[%s3 + $0xe0] sm:$0xf]
    %v228 = vld [vmem:[%s3 + $0xe4] sm:$0xf]
    %v229 = vld [vmem:[%s3 + $0xe8] sm:$0xf]
    %v230 = vld [vmem:[%s3 + $0xec] sm:$0xf]
    %v231 = vld [vmem:[%s3 + $0xf0] sm:$0xf]
    %v232 = vld [vmem:[%s3 + $0xf4] sm:$0xf]
    %v233 = vld [vmem:[%s3 + $0xf8] sm:$0xf]
    %v234 = vld [vmem:[%s3 + $0xfc] sm:$0xf]
    %v235 = vld [vmem:[%s4] sm:$0x1]
    %v237 = vperm.slane %v235, 0
    %v303 = vunpack.c.l.b16 %v171
    %v304 = vunpack.c.l.b16 %v172
    %v305 = vunpack.c.l.b16 %v173
    %v306 = vunpack.c.l.b16 %v174
    %v307 = vunpack.c.l.b16 %v175
    %v308 = vunpack.c.l.b16 %v176
    %v309 = vunpack.c.l.b16 %v177
    %v310 = vunpack.c.l.b16 %v178
    %v311 = vunpack.c.l.b16 %v179
    %v312 = vunpack.c.l.b16 %v180
    %v313 = vunpack.c.l.b16 %v181
    %v314 = vunpack.c.l.b16 %v182
    %v315 = vunpack.c.l.b16 %v183
    %v316 = vunpack.c.l.b16 %v184
    %v317 = vunpack.c.l.b16 %v185
    %v318 = vunpack.c.l.b16 %v186
    %v319 = vunpack.c.l.b16 %v187
    %v320 = vunpack.c.l.b16 %v188
    %v321 = vunpack.c.l.b16 %v189
    %v322 = vunpack.c.l.b16 %v190
    %v323 = vunpack.c.l.b16 %v191
    %v324 = vunpack.c.l.b16 %v192
    %v325 = vunpack.c.l.b16 %v193
    %v326 = vunpack.c.l.b16 %v194
    %v327 = vunpack.c.l.b16 %v195
    %v328 = vunpack.c.l.b16 %v196
    %v329 = vunpack.c.l.b16 %v197
    %v330 = vunpack.c.l.b16 %v198
    %v331 = vunpack.c.l.b16 %v199
    %v332 = vunpack.c.l.b16 %v200
    %v333 = vunpack.c.l.b16 %v201
    %v334 = vunpack.c.l.b16 %v202
    %v335 = vunpack.c.l.b16 %v203
    %v336 = vunpack.c.l.b16 %v204
    %v337 = vunpack.c.l.b16 %v205
    %v338 = vunpack.c.l.b16 %v206
    %v339 = vunpack.c.l.b16 %v207
    %v340 = vunpack.c.l.b16 %v208
    %v341 = vunpack.c.l.b16 %v209
    %v342 = vunpack.c.l.b16 %v210
    %v343 = vunpack.c.l.b16 %v211
    %v344 = vunpack.c.l.b16 %v212
    %v345 = vunpack.c.l.b16 %v213
    %v346 = vunpack.c.l.b16 %v214
    %v347 = vunpack.c.l.b16 %v215
    %v348 = vunpack.c.l.b16 %v216
    %v349 = vunpack.c.l.b16 %v217
    %v350 = vunpack.c.l.b16 %v218
    %v351 = vunpack.c.l.b16 %v219
    %v352 = vunpack.c.l.b16 %v220
    %v353 = vunpack.c.l.b16 %v221
    %v354 = vunpack.c.l.b16 %v222
    %v355 = vunpack.c.l.b16 %v223
    %v356 = vunpack.c.l.b16 %v224
    %v357 = vunpack.c.l.b16 %v225
    %v358 = vunpack.c.l.b16 %v226
    %v359 = vunpack.c.l.b16 %v227
    %v360 = vunpack.c.l.b16 %v228
    %v361 = vunpack.c.l.b16 %v229
    %v362 = vunpack.c.l.b16 %v230
    %v363 = vunpack.c.l.b16 %v231
    %v364 = vunpack.c.l.b16 %v232
    %v365 = vunpack.c.l.b16 %v233
    %v366 = vunpack.c.l.b16 %v234
    %v367 = vpack.c.b16 %v304, %v303
    %v368 = vpack.c.b16 %v306, %v305
    %v369 = vpack.c.b16 %v308, %v307
    %v370 = vpack.c.b16 %v310, %v309
    %v371 = vpack.c.b16 %v312, %v311
    %v372 = vpack.c.b16 %v314, %v313
    %v373 = vpack.c.b16 %v316, %v315
    %v374 = vpack.c.b16 %v318, %v317
    %v375 = vpack.c.b16 %v320, %v319
    %v376 = vpack.c.b16 %v322, %v321
    %v377 = vpack.c.b16 %v324, %v323
    %v378 = vpack.c.b16 %v326, %v325
    %v379 = vpack.c.b16 %v328, %v327
    %v380 = vpack.c.b16 %v330, %v329
    %v381 = vpack.c.b16 %v332, %v331
    %v382 = vpack.c.b16 %v334, %v333
    %v383 = vpack.c.b16 %v336, %v335
    %v384 = vpack.c.b16 %v338, %v337
    %v385 = vpack.c.b16 %v340, %v339
    %v386 = vpack.c.b16 %v342, %v341
    %v387 = vpack.c.b16 %v344, %v343
    %v388 = vpack.c.b16 %v346, %v345
    %v389 = vpack.c.b16 %v348, %v347
    %v390 = vpack.c.b16 %v350, %v349
    %v391 = vpack.c.b16 %v352, %v351
    %v392 = vpack.c.b16 %v354, %v353
    %v393 = vpack.c.b16 %v356, %v355
    %v394 = vpack.c.b16 %v358, %v357
    %v395 = vpack.c.b16 %v360, %v359
    %v396 = vpack.c.b16 %v362, %v361
    %v397 = vpack.c.b16 %v364, %v363
    %v398 = vpack.c.b16 %v366, %v365
    %431 = vmatpush.bf16.msra.mxu0 %v374
    %432 = vmatpush.bf16.msra.mxu0 %v373
    %433 = vmatpush.bf16.msra.mxu0 %v372
    %434 = vmatpush.bf16.msra.mxu0 %v371
    %435 = vmatpush.bf16.msra.mxu0 %v370
    %436 = vmatpush.bf16.msra.mxu0 %v369
    %437 = vmatpush.bf16.msra.mxu0 %v368
    %438 = vmatpush.bf16.msra.mxu0 %v367
    %439 = vmatmul.bf16.gmra.mxu0 %v167
    %v440 = vpop.f32.mrf.mxu0
    %v441 = vadd.f32 %v237, %v440
    %v442 = vpop.f32.mrf.mxu0
    %v443 = vadd.f32 %v237, %v442
    %444 = vdwg.mxu0
    %445 = vmatpush.bf16.msra.mxu0 %v382
    %446 = vmatpush.bf16.msra.mxu0 %v381
    %447 = vmatpush.bf16.msra.mxu0 %v380
    %448 = vmatpush.bf16.msra.mxu0 %v379
    %449 = vmatpush.bf16.msra.mxu0 %v378
    %450 = vmatpush.bf16.msra.mxu0 %v377
    %451 = vmatpush.bf16.msra.mxu0 %v376
    %452 = vmatpush.bf16.msra.mxu0 %v375
    %453 = vmatmul.bf16.gmra.mxu0 %v168
    %v454 = vpop.f32.mrf.mxu0
    %v455 = vadd.f32 %v441, %v454
    %v456 = vpop.f32.mrf.mxu0
    %v457 = vadd.f32 %v443, %v456
    %458 = vdwg.mxu0
    %459 = vmatpush.bf16.msra.mxu0 %v390
    %460 = vmatpush.bf16.msra.mxu0 %v389
    %461 = vmatpush.bf16.msra.mxu0 %v388
    %462 = vmatpush.bf16.msra.mxu0 %v387
    %463 = vmatpush.bf16.msra.mxu0 %v386
    %464 = vmatpush.bf16.msra.mxu0 %v385
    %465 = vmatpush.bf16.msra.mxu0 %v384
    %466 = vmatpush.bf16.msra.mxu0 %v383
    %467 = vmatmul.bf16.gmra.mxu0 %v169
    %v468 = vpop.f32.mrf.mxu0
    %v469 = vadd.f32 %v455, %v468
    %v470 = vpop.f32.mrf.mxu0
    %v471 = vadd.f32 %v457, %v470
    %472 = vdwg.mxu0
    %473 = vmatpush.bf16.msra.mxu0 %v398
    %474 = vmatpush.bf16.msra.mxu0 %v397
    %475 = vmatpush.bf16.msra.mxu0 %v396
    %476 = vmatpush.bf16.msra.mxu0 %v395
    %477 = vmatpush.bf16.msra.mxu0 %v394
    %478 = vmatpush.bf16.msra.mxu0 %v393
    %479 = vmatpush.bf16.msra.mxu0 %v392
    %480 = vmatpush.bf16.msra.mxu0 %v391
    %481 = vmatmul.bf16.gmra.mxu0 %v170
    %v482 = vpop.f32.mrf.mxu0
    %v483 = vadd.f32 %v469, %v482
    %v484 = vpop.f32.mrf.mxu0
    %v485 = vadd.f32 %v471, %v484
    %486 = vdwg.mxu0
    %v487 = vxor.u32 %v483, 2147483648
    %v488 = vxor.u32 %v485, 2147483648
    %v489 = vmul.f32 %v487, 1.442695
    %v490 = vpow.pop %v489
    %v491 = vmul.f32 %v488, 1.442695
    %v492 = vpow.pop %v491
    %v493 = vadd.f32 %v490, 1.0
    %v494 = vadd.f32 %v492, 1.0
    %v495 = vrcp.pop %v493
    %v496 = vmul.f32 %v493, %v495
    %v497 = vsub.f32 1.0, %v496
    %v498 = vmul.f32 %v495, %v497
    %v499 = vadd.f32 %v495, %v498
    %vm500 = vweird.f32 %v493
    %vm501 = vweird.f32 %v495
    %vm502 = vmor %vm500, %vm501
    %v503 = vsel %vm502, %v495, %v499
    %v504 = vand.u32 2147483647, %v493
    %vm505 = vcmp.eq.f32.partialorder %v504, 8.507059e+37
    %v506 = vand.u32 %v493, 2147483648
    %v507 = vor.u32 1.1754944e-38, %v506
    %v508 = vsel %vm505, %v507, %v503
    %v509 = vmul.f32 1.0, %v508
    %v510 = vrcp.pop %v494
    %v511 = vmul.f32 %v494, %v510
    %v512 = vsub.f32 1.0, %v511
    %v513 = vmul.f32 %v510, %v512
    %v514 = vadd.f32 %v510, %v513
    %vm515 = vweird.f32 %v494
    %vm516 = vweird.f32 %v510
    %vm517 = vmor %vm515, %vm516
    %v518 = vsel %vm517, %v510, %v514
    %v519 = vand.u32 2147483647, %v494
    %vm520 = vcmp.eq.f32.partialorder %v519, 8.507059e+37
    %v521 = vand.u32 %v494, 2147483648
    %v522 = vor.u32 1.1754944e-38, %v521
    %v523 = vsel %vm520, %v522, %v518
    %v524 = vmul.f32 1.0, %v523
    %v525 = vld [vmem:[%s5] sm:$0xff]
    %v526 = vld [vmem:[%s5 + $0x8] sm:$0xff]
    %v527 = vld [vmem:[%s5 + $0x10] sm:$0xff]
    %v528 = vld [vmem:[%s5 + $0x18] sm:$0xff]
    %v529 = vld [vmem:[%s5 + $0x20] sm:$0xff]
    %v530 = vld [vmem:[%s5 + $0x28] sm:$0xff]
    %v531 = vld [vmem:[%s5 + $0x30] sm:$0xff]
    %v532 = vld [vmem:[%s5 + $0x38] sm:$0xff]
    %v533 = vld [vmem:[%s5 + $0x40] sm:$0xff]
    %v534 = vld [vmem:[%s5 + $0x48] sm:$0xff]
    %v535 = vld [vmem:[%s5 + $0x50] sm:$0xff]
    %v536 = vld [vmem:[%s5 + $0x58] sm:$0xff]
    %v537 = vld [vmem:[%s5 + $0x60] sm:$0xff]
    %v538 = vld [vmem:[%s5 + $0x68] sm:$0xff]
    %v539 = vld [vmem:[%s5 + $0x70] sm:$0xff]
    %v540 = vld [vmem:[%s5 + $0x78] sm:$0xff]
    %vm541 = vcmask 261120
    %v543 = vsel %vm541, %v509, 0
    %v546 = vsel %vm541, %v524, 0
    %548 = vmatpush.msra.mxu0 0.0
    %549 = vmatpush.msra.mxu0 0.0
    %550 = vmatpush.msra.mxu0 0.0
    %551 = vmatpush.msra.mxu0 0.0
    %552 = vmatpush.msra.mxu0 0.0
    %553 = vmatpush.msra.mxu0 0.0
    %554 = vmatpush.msra.mxu0 0.0
    %555 = vmatpush.msra.mxu0 0.0
    %556 = vmatpush.msra.mxu0 0.0
    %557 = vmatpush.msra.mxu0 0.0
    %558 = vmatpush.msra.mxu0 0.0
    %559 = vmatpush.msra.mxu0 0.0
    %560 = vmatpush.msra.mxu0 %v537
    %561 = vmatpush.msra.mxu0 %v533
    %562 = vmatpush.msra.mxu0 %v529
    %563 = vmatpush.msra.mxu0 %v525
    %564 = vmatmul.f32.gmra.mxu0 %v543
    %v565 = vpop.f32.mrf.mxu0
    %v566 = vadd.f32 0.0, %v565
    %567 = vmatmul.f32.gmra.mxu0 %v546
    %v568 = vpop.f32.mrf.mxu0
    %v569 = vadd.f32 0.0, %v568
    %570 = vdwg.mxu0
    %571 = vmatpush.msra.mxu0 0.0
    %572 = vmatpush.msra.mxu0 0.0
    %573 = vmatpush.msra.mxu0 0.0
    %574 = vmatpush.msra.mxu0 0.0
    %575 = vmatpush.msra.mxu0 0.0
    %576 = vmatpush.msra.mxu0 0.0
    %577 = vmatpush.msra.mxu0 0.0
    %578 = vmatpush.msra.mxu0 0.0
    %579 = vmatpush.msra.mxu0 0.0
    %580 = vmatpush.msra.mxu0 0.0
    %581 = vmatpush.msra.mxu0 0.0
    %582 = vmatpush.msra.mxu0 0.0
    %583 = vmatpush.msra.mxu0 %v538
    %584 = vmatpush.msra.mxu0 %v534
    %585 = vmatpush.msra.mxu0 %v530
    %586 = vmatpush.msra.mxu0 %v526
    %587 = vmatmul.f32.gmra.mxu0 %v543
    %v588 = vpop.f32.mrf.mxu0
    %v589 = vadd.f32 0.0, %v588
    %590 = vmatmul.f32.gmra.mxu0 %v546
    %v591 = vpop.f32.mrf.mxu0
    %v592 = vadd.f32 0.0, %v591
    %593 = vdwg.mxu0
    %594 = vmatpush.msra.mxu0 0.0
    %595 = vmatpush.msra.mxu0 0.0
    %596 = vmatpush.msra.mxu0 0.0
    %597 = vmatpush.msra.mxu0 0.0
    %598 = vmatpush.msra.mxu0 0.0
    %599 = vmatpush.msra.mxu0 0.0
    %600 = vmatpush.msra.mxu0 0.0
    %601 = vmatpush.msra.mxu0 0.0
    %602 = vmatpush.msra.mxu0 0.0
    %603 = vmatpush.msra.mxu0 0.0
    %604 = vmatpush.msra.mxu0 0.0
    %605 = vmatpush.msra.mxu0 0.0
    %606 = vmatpush.msra.mxu0 %v539
    %607 = vmatpush.msra.mxu0 %v535
    %608 = vmatpush.msra.mxu0 %v531
    %609 = vmatpush.msra.mxu0 %v527
    %610 = vmatmul.f32.gmra.mxu0 %v543
    %v611 = vpop.f32.mrf.mxu0
    %v612 = vadd.f32 0.0, %v611
    %613 = vmatmul.f32.gmra.mxu0 %v546
    %v614 = vpop.f32.mrf.mxu0
    %v615 = vadd.f32 0.0, %v614
    %616 = vdwg.mxu0
    %617 = vmatpush.msra.mxu0 0.0
    %618 = vmatpush.msra.mxu0 0.0
    %619 = vmatpush.msra.mxu0 0.0
    %620 = vmatpush.msra.mxu0 0.0
    %621 = vmatpush.msra.mxu0 0.0
    %622 = vmatpush.msra.mxu0 0.0
    %623 = vmatpush.msra.mxu0 0.0
    %624 = vmatpush.msra.mxu0 0.0
    %625 = vmatpush.msra.mxu0 0.0
    %626 = vmatpush.msra.mxu0 0.0
    %627 = vmatpush.msra.mxu0 0.0
    %628 = vmatpush.msra.mxu0 0.0
    %629 = vmatpush.msra.mxu0 %v540
    %630 = vmatpush.msra.mxu0 %v536
    %631 = vmatpush.msra.mxu0 %v532
    %632 = vmatpush.msra.mxu0 %v528
    %633 = vmatmul.f32.gmra.mxu0 %v543
    %v634 = vpop.f32.mrf.mxu0
    %v635 = vadd.f32 0.0, %v634
    %636 = vmatmul.f32.gmra.mxu0 %v546
    %v637 = vpop.f32.mrf.mxu0
    %v638 = vadd.f32 0.0, %v637
    %639 = vdwg.mxu0
    %v640 = vmul.f32 %v566, %v612
    %v641 = vmul.f32 %v589, %v635
    %v642 = vmul.f32 %v569, %v615
    %v643 = vmul.f32 %v592, %v638
    %644 = vst [vmem:[#allocation7] sm:$0xff] %v640
    %645 = vst [vmem:[#allocation7 + $0x8] sm:$0xff] %v641
    %646 = vst [vmem:[#allocation7 + $0x10] sm:$0xff] %v642
    %647 = vst [vmem:[#allocation7 + $0x18] sm:$0xff] %v643
    // Predicated region
    $region34: #{tpu_custom_call.1} parent=1 // pred_check
      _
    $region35: #{tpu_custom_call.1} parent=1 // pred_check_branch
      %649 = sbr.rel (0) target = $region37
    $region36: #{tpu_custom_call.1} parent=1 // pred_region
      %651 = vsyncadd [#allocation3], 0
      %s652 = sshll.u32 [#allocation7], 4
      %s653 = int_to_ptr.vmem [resolvable:$true] %s652
      %s654 = sshll.u32 %s6, 4
      %s655 = int_to_ptr.hbm [resolvable:$true] %s654
      %660 = dma.vmem_to_hbm [thread:$0]  %s653, 512, %s655, [#allocation3], 256, 256, 16
    $region37: #{tpu_custom_call.1} parent=1 // pred_fallthru
      _
    // Predicated region
    $region38: #{tpu_custom_call.1} parent=1 // pred_check
      _
    $region39: #{tpu_custom_call.1} parent=1 // pred_check_branch
      %662 = sbr.rel (0) target = $region41
    $region40: #{tpu_custom_call.1} parent=1 // pred_region
      %664 = dma.done [#allocation3], 512
    $region41: #{tpu_custom_call.1} parent=1 // pred_fallthru
      _
    %665 = vsyncpa [#allocation3], 1
    %666 = vsyncpa [#allocation4], 1
    %667 = vsyncpa [#allocation6], 1

</llo_original>
